<compile_context>
chip_gen: v5e
topology: v5e:2x2
jax: 0.10.0
libtpu: 0.0.40
codegen_flags: <defaults>
</compile_context>

<pallas_src>
import functools

import jax
import jax.numpy as jnp
from jax.experimental import pallas as pl
from jax.experimental.pallas import tpu as pltpu

MIN_NORM = 1e-15
ATANH_CLAMP = 1e-15          # matches the PyTorch HGCN clamp (a no-op in f32, like torch)
PROJ_EPS_F32 = 4e-3          # PoincareBall.eps[torch.float32]
_LANES = 128


def _hypact_math(x, rowsum, c_in, c_out):
    """Shared HypAct math on one f32 tile.

    `rowsum(v)` returns the per-(original)-row sum of `v` over the feature axis,
    broadcastable back against `v` (either (tm, 1) or lane-broadcast (tm, 128)).
    EUP ops per tile: rsqrt, div, log, rsqrt, tanh  (5 total).
    """
    sc_in = c_in ** 0.5
    sc_out = c_out ** 0.5
    min_sq = MIN_NORM * MIN_NORM

    # ---- logmap0(x, c_in) ----
    s = jnp.maximum(rowsum(x * x), min_sq)
    inv_norm = jax.lax.rsqrt(s)                          # EUP; 1/||x||
    x_norm = s * inv_norm                                # ||x||   (VPU mul, no sqrt)
    # arg >= 0 always, so a one-sided clamp suffices (matches torch's clamp in f32).
    arg = jnp.minimum(sc_in * x_norm, 1.0 - ATANH_CLAMP)
    artanh = 0.5 * jnp.log((1.0 + arg) / (1.0 - arg))    # EUP div + log
    xt = (artanh * inv_norm * (1.0 / sc_in)) * x         # 1/(sc_in*||x||) == inv_norm/sc_in

    # ---- act = ReLU ; proj_tan0 = identity on the Poincare ball ----
    xt = jnp.maximum(xt, 0.0)

    # ---- expmap0(xt, c_out) fused with proj(., c_out) ----
    s2 = jnp.maximum(rowsum(xt * xt), min_sq)
    inv_u = jax.lax.rsqrt(s2)                            # EUP; 1/||xt||
    u_norm = s2 * inv_u
    tanh_u = jnp.tanh(sc_out * u_norm)                   # EUP
    # ||gamma|| == tanh_u / sc_out analytically, so the projection reduces to
    # capping the scalar multiplier at (1 - eps): no third reduction, no extra divide.
    factor = jnp.minimum(tanh_u, 1.0 - PROJ_EPS_F32) * inv_u * (1.0 / sc_out)
    return factor * xt


def _hypact_kernel_dense(x_ref, o_ref, *, c_in, c_out):
    """Tile (tm, D): per-row norm via a lane (XLU) reduction. Used when D >= 128."""
    x = x_ref[...].astype(jnp.float32)
    rowsum = lambda v: jnp.sum(v, axis=-1, keepdims=True)
    o_ref[...] = _hypact_math(x, rowsum, c_in, c_out).astype(o_ref.dtype)


def _hypact_kernel_packed(seg_ref, x_ref, o_ref, *, c_in, c_out):
    """Tile (tm, 128) holding 128//D original rows per vreg row (lane-dense I/O).

    The per-row sum is a segmented sum on the otherwise-idle MXU against a
    block-diagonal 0/1 matrix; the result is already broadcast across each
    segment's lanes, so everything else stays purely elementwise (no relayout,
    no XLU reduce).  Summing <= 128 non-negative f32 squares through the MXU's
    f32 path is exact far beyond the tolerance we need, so a single dot suffices.
    """
    x = x_ref[...].astype(jnp.float32)
    seg = seg_ref[...]
    rowsum = lambda v: jnp.dot(v, seg, preferred_element_type=jnp.float32)
    o_ref[...] = _hypact_math(x, rowsum, c_in, c_out).astype(o_ref.dtype)


def _choose_tiling(rows, row_bytes, block_bytes):
    """Row tile + grid: ~block_bytes per tile, tm a multiple of 16, even grid when > 1
    (balances v7x's two TensorCores under dimension_semantics=('parallel',))."""
    rows_up = ((rows + 15) // 16) * 16
    grid = max(1, pl.cdiv(rows * row_bytes, block_bytes))
    if grid > 1 and grid % 2:
        grid += 1
    tm = ((pl.cdiv(rows, grid) + 15) // 16) * 16
    tm = max(16, min(tm, rows_up))
    grid = pl.cdiv(rows, tm)            # Pallas masks the partial last block.
    return int(tm), int(grid)


def hyp_act(x, c_in=1.0, c_out=1.0, *, block_bytes=2 << 20):
    """HypAct forward. x: (N, D). Returns an array of the same shape and dtype."""
    N, D = x.shape
    c_in = float(c_in)
    c_out = float(c_out)
    itemsize = jnp.dtype(x.dtype).itemsize

    # Lane packing: for D < 128, pad the feature axis (if needed) to the smallest
    # divisor of 128 and fold `pack` original rows into one 128-lane row via a free
    # row-major reshape, so loads/stores are full-width (no masked vst.msk).
    if D < _LANES:
        Dp = D
        while _LANES % Dp:
            Dp += 1
        pack = _LANES // Dp
    else:
        Dp, pack = D, 1
    lanes = pack * Dp
    col_pad = Dp - D
    row_pad = (-N) % pack               # < pack rows, only when N % pack != 0

    xp = x
    if col_pad or row_pad:
        # Zero pads are inert: zero features stay zero through logmap0/ReLU/expmap0/proj.
        xp = jnp.pad(xp, ((0, row_pad), (0, col_pad)))
    rows = (N + row_pad) // pack
    if pack > 1:
        xp = xp.reshape(rows, lanes)    # free row-major reshape -> lane-dense I/O

    tm, grid = _choose_tiling(rows, lanes * itemsize, block_bytes)

    # Advisory cost + a VMEM limit sized from the actual footprint (double-buffered
    # in/out + ~10 live f32 tile temporaries + the seg matrix), capped for v7x's 64 MiB.
    tile_io = tm * lanes * itemsize
    tile_f32 = tm * lanes * 4
    seg_bytes = 2 * _LANES * _LANES * 4 if pack > 1 else 0
    footprint = 4 * tile_io + 10 * tile_f32 + seg_bytes + (2 << 20)
    vmem_limit = int(min(56 << 20, max(20 << 20, footprint)))

    cost = pl.CostEstimate(
        flops=int(rows * lanes * 24 + (4 * rows * lanes * _LANES if pack > 1 else 0)),
        transcendentals=int(5 * rows * (lanes if pack > 1 else 1)),
        bytes_accessed=int(2 * rows * lanes * itemsize + seg_bytes // 2),
    )
    cparams = pltpu.CompilerParams(
        dimension_semantics=("parallel",),
        vmem_limit_bytes=vmem_limit,
    )

    if pack > 1:
        # Block-diagonal 0/1 segment matrix: seg[j, k] = 1 iff lanes j, k belong to the
        # same original row.  (v @ seg) == per-row sum, broadcast over that row's lanes.
        lane = jnp.arange(_LANES, dtype=jnp.int32)
        seg = (lane[:, None] // Dp == lane[None, :] // Dp).astype(jnp.float32)
        kernel = functools.partial(_hypact_kernel_packed, c_in=c_in, c_out=c_out)
        out = pl.pallas_call(
            kernel,
            out_shape=jax.ShapeDtypeStruct((rows, lanes), x.dtype),
            grid_spec=pltpu.PrefetchScalarGridSpec(
                num_scalar_prefetch=0,
                grid=(grid,),
                in_specs=[pl.BlockSpec((_LANES, _LANES), lambda i: (0, 0)),
                          pl.BlockSpec((tm, lanes), lambda i: (i, 0))],
                out_specs=pl.BlockSpec((tm, lanes), lambda i: (i, 0)),
            ),
            compiler_params=cparams,
            cost_estimate=cost,
        )(seg, xp)
    else:
        kernel = functools.partial(_hypact_kernel_dense, c_in=c_in, c_out=c_out)
        out = pl.pallas_call(
            kernel,
            out_shape=jax.ShapeDtypeStruct((rows, lanes), x.dtype),
            grid_spec=pltpu.PrefetchScalarGridSpec(
                num_scalar_prefetch=0,
                grid=(grid,),
                in_specs=[pl.BlockSpec((tm, lanes), lambda i: (i, 0))],
                out_specs=pl.BlockSpec((tm, lanes), lambda i: (i, 0)),
            ),
            compiler_params=cparams,
            cost_estimate=cost,
        )(xp)

    if pack > 1:
        out = out.reshape(rows * pack, Dp)      # free row-major reshape back
    if row_pad or col_pad:
        out = out[:N, :D]
    return out


def hyp_act_ref(x, c_in=1.0, c_out=1.0):
    """Pure-JAX reference mirroring the PyTorch PoincareBall math exactly."""
    x = x.astype(jnp.float32)
    sc_in, sc_out = c_in ** 0.5, c_out ** 0.5
    xn = jnp.maximum(jnp.linalg.norm(x, axis=-1, keepdims=True), MIN_NORM)
    arg = jnp.clip(sc_in * xn, -1.0 + ATANH_CLAMP, 1.0 - ATANH_CLAMP)
    xt = (0.5 * jnp.log((1.0 + arg) / (1.0 - arg)) / (sc_in * xn)) * x
    xt = jax.nn.relu(xt)
    un = jnp.maximum(jnp.linalg.norm(xt, axis=-1, keepdims=True), MIN_NORM)
    g = (jnp.tanh(sc_out * un) / (sc_out * un)) * xt
    gn = jnp.maximum(jnp.linalg.norm(g, axis=-1, keepdims=True), MIN_NORM)
    maxnorm = (1.0 - PROJ_EPS_F32) / sc_out
    return jnp.where(gn > maxnorm, g / gn * maxnorm, g)


if __name__ == "__main__":
    key = jax.random.PRNGKey(0)
    cases = [
        ((64, 32), 1.0, 0.5),    # D | 128, no padding      -> lane-packed MXU segmented-sum path
        ((100, 128), 0.7, 1.3),  # D >= 128, partial block  -> dense path, masked last block
        ((24, 48), 2.0, 1.0),    # D < 128, not a divisor   -> column pad 48->64, packed path
        ((37, 16), 1.0, 1.0),    # N % pack != 0            -> small row pad, packed path
    ]
    for (N, D), c_in, c_out in cases:
        key, sub = jax.random.split(key)
        # Points comfortably inside the Poincare ball: ||x|| ~ 0.5 / sqrt(c_in).
        scale = 0.5 / (D ** 0.5 * c_in ** 0.5)
        x = scale * jax.random.normal(sub, (N, D), dtype=jnp.float32)

        out = jax.block_until_ready(hyp_act(x, c_in, c_out))
        ref = hyp_act_ref(x, c_in, c_out)

        assert out.shape == (N, D) and out.dtype == x.dtype
        assert jnp.allclose(out, ref, atol=1e-5, rtol=1e-5), f"mismatch for N={N}, D={D}"

    print("KERNEL_OK")
</pallas_src>

<mosaic_0001>
module attributes {stable_mosaic.version = 11 : i64} {
  func.func @_hypact_kernel_packed(%arg0: i32, %arg1: memref<128x128xf32, #tpu.memory_space<vmem>>, %arg2: memref<16x128xf32, #tpu.memory_space<vmem>>, %arg3: memref<16x128xf32, #tpu.memory_space<vmem>>) attributes {dimension_semantics = [#tpu.dimension_semantics<parallel>], iteration_bounds = array<i64: 1>, scalar_prefetch = 0 : i64, scratch_operands = 0 : i64, tpu.core_type = #tpu.core_type<tc>, window_params = [{pipeline_mode = #tpu.pipeline_mode<synchronous>, transform_indices = @transform_0, window_bounds = array<i64: 128, 128>}, {transform_indices = @transform_1, window_bounds = array<i64: 16, 128>}, {transform_indices = @transform_2, window_bounds = array<i64: 16, 128>}]} {
    %c0 = arith.constant 0 : index
    %c0_0 = arith.constant 0 : index
    %0 = vector.load %arg2[%c0, %c0_0] : memref<16x128xf32, #tpu.memory_space<vmem>>, vector<16x128xf32>
    %c0_1 = arith.constant 0 : index
    %c0_2 = arith.constant 0 : index
    %1 = vector.load %arg1[%c0_1, %c0_2] : memref<128x128xf32, #tpu.memory_space<vmem>>, vector<128x128xf32>
    %2 = arith.mulf %0, %0 : vector<16x128xf32>
    %cst = arith.constant dense<0.000000e+00> : vector<16x128xf32>
    %3 = tpu.matmul %2, %1, %cst {dimension_numbers = #tpu.dot_dimension_numbers<[1], [0], [0], [1], [0, 0, 1, 1], [], []>} : vector<16x128xf32>, vector<128x128xf32>, vector<16x128xf32> -> vector<16x128xf32>
    %cst_3 = arith.constant 1.000000e-30 : f32
    %4 = vector.broadcast %cst_3 : f32 to vector<16x128xf32>
    %5 = arith.maximumf %3, %4 : vector<16x128xf32>
    %6 = math.rsqrt %5 : vector<16x128xf32>
    %7 = arith.mulf %5, %6 : vector<16x128xf32>
    %cst_4 = arith.constant 1.000000e+00 : f32
    %8 = vector.broadcast %cst_4 : f32 to vector<16x128xf32>
    %9 = arith.mulf %8, %7 : vector<16x128xf32>
    %cst_5 = arith.constant 1.000000e+00 : f32
    %10 = vector.broadcast %cst_5 : f32 to vector<16x128xf32>
    %11 = arith.minimumf %9, %10 : vector<16x128xf32>
    %cst_6 = arith.constant 1.000000e+00 : f32
    %12 = vector.broadcast %cst_6 : f32 to vector<16x128xf32>
    %13 = arith.addf %12, %11 : vector<16x128xf32>
    %cst_7 = arith.constant 1.000000e+00 : f32
    %14 = vector.broadcast %cst_7 : f32 to vector<16x128xf32>
    %15 = arith.subf %14, %11 : vector<16x128xf32>
    %16 = arith.divf %13, %15 : vector<16x128xf32>
    %17 = math.log %16 : vector<16x128xf32>
    %cst_8 = arith.constant 5.000000e-01 : f32
    %18 = vector.broadcast %cst_8 : f32 to vector<16x128xf32>
    %19 = arith.mulf %18, %17 : vector<16x128xf32>
    %20 = arith.mulf %19, %6 : vector<16x128xf32>
    %cst_9 = arith.constant 1.000000e+00 : f32
    %21 = vector.broadcast %cst_9 : f32 to vector<16x128xf32>
    %22 = arith.mulf %20, %21 : vector<16x128xf32>
    %23 = arith.mulf %22, %0 : vector<16x128xf32>
    %cst_10 = arith.constant 0.000000e+00 : f32
    %24 = vector.broadcast %cst_10 : f32 to vector<16x128xf32>
    %25 = arith.maximumf %23, %24 : vector<16x128xf32>
    %26 = arith.mulf %25, %25 : vector<16x128xf32>
    %cst_11 = arith.constant dense<0.000000e+00> : vector<16x128xf32>
    %27 = tpu.matmul %26, %1, %cst_11 {dimension_numbers = #tpu.dot_dimension_numbers<[1], [0], [0], [1], [0, 0, 1, 1], [], []>} : vector<16x128xf32>, vector<128x128xf32>, vector<16x128xf32> -> vector<16x128xf32>
    %cst_12 = arith.constant 1.000000e-30 : f32
    %28 = vector.broadcast %cst_12 : f32 to vector<16x128xf32>
    %29 = arith.maximumf %27, %28 : vector<16x128xf32>
    %30 = math.rsqrt %29 : vector<16x128xf32>
    %31 = arith.mulf %29, %30 : vector<16x128xf32>
    %cst_13 = arith.constant 0.707106769 : f32
    %32 = vector.broadcast %cst_13 : f32 to vector<16x128xf32>
    %33 = arith.mulf %32, %31 : vector<16x128xf32>
    %34 = math.tanh %33 : vector<16x128xf32>
    %cst_14 = arith.constant 0.995999991 : f32
    %35 = vector.broadcast %cst_14 : f32 to vector<16x128xf32>
    %36 = arith.minimumf %34, %35 : vector<16x128xf32>
    %37 = arith.mulf %36, %30 : vector<16x128xf32>
    %cst_15 = arith.constant 1.41421354 : f32
    %38 = vector.broadcast %cst_15 : f32 to vector<16x128xf32>
    %39 = arith.mulf %37, %38 : vector<16x128xf32>
    %40 = arith.mulf %39, %25 : vector<16x128xf32>
    %c0_16 = arith.constant 0 : index
    %c0_17 = arith.constant 0 : index
    %41 = vector.load %arg3[%c0_16, %c0_17] : memref<16x128xf32, #tpu.memory_space<vmem>>, vector<16x128xf32>
    tpu.vector_store %arg3[%c0_16, %c0_17], %40 {strides = array<i32>} : memref<16x128xf32, #tpu.memory_space<vmem>>, vector<16x128xf32>,
    return
  }
  func.func @transform_0(%arg0: i32) -> (i32, i32) {
    %c0_i32 = arith.constant 0 : i32
    %c0_i32_0 = arith.constant 0 : i32
    %c0_i32_1 = arith.constant 0 : i32
    return %c0_i32, %c0_i32_0 : i32, i32
  }
  func.func @transform_1(%arg0: i32) -> (i32, i32) {
    %c0_i32 = arith.constant 0 : i32
    %c0_i32_0 = arith.constant 0 : i32
    return %arg0, %c0_i32 : i32, i32
  }
  func.func @transform_2(%arg0: i32) -> (i32, i32) {
    %c0_i32 = arith.constant 0 : i32
    %c0_i32_0 = arith.constant 0 : i32
    return %arg0, %c0_i32 : i32, i32
  }
}

</mosaic_0001>

<llo_original>
// kernel: tpu_custom_call.1
$region0: #{tpu_custom_call.1}
  #allocation0 [shape = 'u32[]', space=smem, size = 0x4, offset = 0x4, fixed_abs, tag = 'smem constant byte address 0x4 - core index']
  #allocation1 [shape = 'u32[72,128]{1,0:T(1,128)}', space=vmem, size = 0x9000, scoped, tag = 'internal scratch']
  %s0 = inlined_call_operand.hbm [shape: f32[128,128], index: 0, kind: input, shape index: {}]
  %s1 = inlined_call_operand.hbm [shape: f32[16,128], index: 1, kind: input, shape index: {}]
  %s2 = inlined_call_operand.hbm [shape: f32[16,128], index: 2, kind: output, shape index: {}]
  %s3 = sld [smem:[#allocation0]]
  $region26: #{tpu_custom_call.1} parent=0
    _
  %s5 = ssub.s32 1, %s3
  %s6 = scalar_select 0, %s5, %s3
  $region1: #{tpu_custom_call.1} parent=0
    #allocation2 [shape = 'u8[65536]{0}', space=vmem, size = 0x10000, scoped, tag = 'input window, operand 0, single buffered']
    #allocation3 [shape = 's32[1]{0}', space=sflag, size = 0x4, scoped, tag = 'scoped memory for tpu_custom_call.1']
    #allocation4 [shape = 's32[1]{0}', space=sflag, size = 0x4, scoped, tag = 'scoped memory for tpu_custom_call.1']
    #allocation5 [shape = 'u8[8192]{0}', space=vmem, size = 0x2000, scoped, tag = 'input window, operand 1, single buffered']
    #allocation6 [shape = 's32[1]{0}', space=sflag, size = 0x4, scoped, tag = 'scoped memory for tpu_custom_call.1']
    #allocation7 [shape = 'u8[8192]{0}', space=vmem, size = 0x2000, scoped, tag = 'output window, operand 0, single buffered']
    %7 = vsyncpa [#allocation3], 0
    %8 = vsyncpa [#allocation6], 0
    %9 = vsyncpa [#allocation4], 0
    // Predicated region
    $region2: #{tpu_custom_call.1} parent=1 // pred_check
      _
    $region3: #{tpu_custom_call.1} parent=1 // pred_check_branch
      %11 = sbr.rel (0) target = $region5
    $region4: #{tpu_custom_call.1} parent=1 // pred_region
      %13 = vsyncadd [#allocation3], 0
      %s14 = sshll.u32 %s0, 4
      %s15 = int_to_ptr.hbm [resolvable:$true] %s14
      %s16 = sshll.u32 [#allocation2], 4
      %s17 = int_to_ptr.vmem [resolvable:$true] %s16
      %22 = dma.hbm_to_vmem [thread:$0]  %s15, 2048, %s17, [#allocation3], 128, 128, 8
    $region5: #{tpu_custom_call.1} parent=1 // pred_fallthru
      _
    // Predicated region
    $region6: #{tpu_custom_call.1} parent=1 // pred_check
      _
    $region7: #{tpu_custom_call.1} parent=1 // pred_check_branch
      %24 = sbr.rel (0) target = $region9
    $region8: #{tpu_custom_call.1} parent=1 // pred_region
      %26 = vsyncadd [#allocation6], 0
      %s27 = sshll.u32 %s1, 4
      %s28 = int_to_ptr.hbm [resolvable:$true] %s27
      %s29 = sshll.u32 [#allocation5], 4
      %s30 = int_to_ptr.vmem [resolvable:$true] %s29
      %35 = dma.hbm_to_vmem [thread:$0]  %s28, 256, %s30, [#allocation6], 128, 128, 8
    $region9: #{tpu_custom_call.1} parent=1 // pred_fallthru
      _
    // Predicated region
    $region10: #{tpu_custom_call.1} parent=1 // pred_check
      _
    $region11: #{tpu_custom_call.1} parent=1 // pred_check_branch
      %37 = sbr.rel (0) target = $region13
    $region12: #{tpu_custom_call.1} parent=1 // pred_region
      %39 = dma.done [#allocation3], 2048
    $region13: #{tpu_custom_call.1} parent=1 // pred_fallthru
      _
    // Predicated region
    $region14: #{tpu_custom_call.1} parent=1 // pred_check
      _
    $region15: #{tpu_custom_call.1} parent=1 // pred_check_branch
      %41 = sbr.rel (0) target = $region17
    $region16: #{tpu_custom_call.1} parent=1 // pred_region
      %43 = dma.done [#allocation6], 256
    $region17: #{tpu_custom_call.1} parent=1 // pred_fallthru
      _
    %v44 = vld [vmem:[#allocation5] sm:$0xff]
    %v45 = vld [vmem:[#allocation5 + $0x8] sm:$0xff]
    %v46 = vld [vmem:[#allocation2] sm:$0xff]
    %v47 = vld [vmem:[#allocation2 + $0x8] sm:$0xff]
    %v48 = vld [vmem:[#allocation2 + $0x10] sm:$0xff]
    %v49 = vld [vmem:[#allocation2 + $0x18] sm:$0xff]
    %v50 = vld [vmem:[#allocation2 + $0x20] sm:$0xff]
    %v51 = vld [vmem:[#allocation2 + $0x28] sm:$0xff]
    %v52 = vld [vmem:[#allocation2 + $0x30] sm:$0xff]
    %v53 = vld [vmem:[#allocation2 + $0x38] sm:$0xff]
    %v54 = vld [vmem:[#allocation2 + $0x40] sm:$0xff]
    %v55 = vld [vmem:[#allocation2 + $0x48] sm:$0xff]
    %v56 = vld [vmem:[#allocation2 + $0x50] sm:$0xff]
    %v57 = vld [vmem:[#allocation2 + $0x58] sm:$0xff]
    %v58 = vld [vmem:[#allocation2 + $0x60] sm:$0xff]
    %v59 = vld [vmem:[#allocation2 + $0x68] sm:$0xff]
    %v60 = vld [vmem:[#allocation2 + $0x70] sm:$0xff]
    %v61 = vld [vmem:[#allocation2 + $0x78] sm:$0xff]
    %v62 = vmul.f32 %v44, %v44
    %v63 = vmul.f32 %v45, %v45
    %64 = vmatpush.msra.mxu0 %v61
    %65 = vmatpush.msra.mxu0 %v60
    %66 = vmatpush.msra.mxu0 %v59
    %67 = vmatpush.msra.mxu0 %v58
    %68 = vmatpush.msra.mxu0 %v57
    %69 = vmatpush.msra.mxu0 %v56
    %70 = vmatpush.msra.mxu0 %v55
    %71 = vmatpush.msra.mxu0 %v54
    %72 = vmatpush.msra.mxu0 %v53
    %73 = vmatpush.msra.mxu0 %v52
    %74 = vmatpush.msra.mxu0 %v51
    %75 = vmatpush.msra.mxu0 %v50
    %76 = vmatpush.msra.mxu0 %v49
    %77 = vmatpush.msra.mxu0 %v48
    %78 = vmatpush.msra.mxu0 %v47
    %79 = vmatpush.msra.mxu0 %v46
    %80 = vmatmul.f32.gmra.mxu0 %v62
    %v81 = vpop.f32.mrf.mxu0
    %v82 = vadd.f32 0.0, %v81
    %83 = vmatmul.f32.gmra.mxu0 %v63
    %v84 = vpop.f32.mrf.mxu0
    %v85 = vadd.f32 0.0, %v84
    %86 = vdwg.mxu0
    %v87 = vmax.f32 %v82, 1e-30
    %v88 = vmax.f32 %v85, 1e-30
    %v89 = vrsqrt.pop %v87
    %v90 = vmul.f32 %v89, %v87
    %v91 = vmul.f32 %v90, %v89
    %v92 = vmul.f32 0.5, %v91
    %v93 = vsub.f32 1.5, %v92
    %v94 = vmul.f32 %v89, %v93
    %vm95 = vweird.f32 %v87
    %vm96 = vweird.f32 %v89
    %vm97 = vmor %vm95, %vm96
    %v98 = vsel %vm97, %v89, %v94
    %v99 = vrsqrt.pop %v88
    %v100 = vmul.f32 %v99, %v88
    %v101 = vmul.f32 %v100, %v99
    %v102 = vmul.f32 0.5, %v101
    %v103 = vsub.f32 1.5, %v102
    %v104 = vmul.f32 %v99, %v103
    %vm105 = vweird.f32 %v88
    %vm106 = vweird.f32 %v99
    %vm107 = vmor %vm105, %vm106
    %v108 = vsel %vm107, %v99, %v104
    %v109 = vmul.f32 %v87, %v98
    %v110 = vmul.f32 %v88, %v108
    %v111 = vmin.f32 %v109, 1.0
    %v112 = vmin.f32 %v110, 1.0
    %v113 = vadd.f32 %v111, 1.0
    %v114 = vadd.f32 %v112, 1.0
    %v115 = vsub.f32 1.0, %v111
    %v116 = vsub.f32 1.0, %v112
    %v117 = vrcp.pop %v115
    %v118 = vmul.f32 %v115, %v117
    %v119 = vsub.f32 1.0, %v118
    %v120 = vmul.f32 %v117, %v119
    %v121 = vadd.f32 %v117, %v120
    %vm122 = vweird.f32 %v115
    %vm123 = vweird.f32 %v117
    %vm124 = vmor %vm122, %vm123
    %v125 = vsel %vm124, %v117, %v121
    %v126 = vand.u32 2147483647, %v115
    %vm127 = vcmp.eq.f32.partialorder %v126, 8.507059e+37
    %v128 = vand.u32 %v115, 2147483648
    %v129 = vor.u32 1.1754944e-38, %v128
    %v130 = vsel %vm127, %v129, %v125
    %v131 = vmul.f32 %v113, %v130
    %v132 = vrcp.pop %v116
    %v133 = vmul.f32 %v116, %v132
    %v134 = vsub.f32 1.0, %v133
    %v135 = vmul.f32 %v132, %v134
    %v136 = vadd.f32 %v132, %v135
    %vm137 = vweird.f32 %v116
    %vm138 = vweird.f32 %v132
    %vm139 = vmor %vm137, %vm138
    %v140 = vsel %vm139, %v132, %v136
    %v141 = vand.u32 2147483647, %v116
    %vm142 = vcmp.eq.f32.partialorder %v141, 8.507059e+37
    %v143 = vand.u32 %v116, 2147483648
    %v144 = vor.u32 1.1754944e-38, %v143
    %v145 = vsel %vm142, %v144, %v140
    %v146 = vmul.f32 %v114, %v145
    %v147 = vlog2.pop %v131
    %v148 = vmul.f32 %v147, 0.6931472
    %v149 = vlog2.pop %v146
    %v150 = vmul.f32 %v149, 0.6931472
    %v151 = vmul.f32 %v148, 0.5
    %v152 = vmul.f32 %v150, 0.5
    %v153 = vmul.f32 %v151, %v98
    %v154 = vmul.f32 %v152, %v108
    %v155 = vmul.f32 %v153, %v44
    %v156 = vmul.f32 %v154, %v45
    %v157 = vmax.f32 %v155, 0.0
    %v158 = vmax.f32 %v156, 0.0
    %v159 = vmul.f32 %v157, %v157
    %v160 = vmul.f32 %v158, %v158
    %161 = vmatpush.msra.mxu0 %v61
    %162 = vmatpush.msra.mxu0 %v60
    %163 = vmatpush.msra.mxu0 %v59
    %164 = vmatpush.msra.mxu0 %v58
    %165 = vmatpush.msra.mxu0 %v57
    %166 = vmatpush.msra.mxu0 %v56
    %167 = vmatpush.msra.mxu0 %v55
    %168 = vmatpush.msra.mxu0 %v54
    %169 = vmatpush.msra.mxu0 %v53
    %170 = vmatpush.msra.mxu0 %v52
    %171 = vmatpush.msra.mxu0 %v51
    %172 = vmatpush.msra.mxu0 %v50
    %173 = vmatpush.msra.mxu0 %v49
    %174 = vmatpush.msra.mxu0 %v48
    %175 = vmatpush.msra.mxu0 %v47
    %176 = vmatpush.msra.mxu0 %v46
    %177 = vmatmul.f32.gmra.mxu0 %v159
    %v178 = vpop.f32.mrf.mxu0
    %v179 = vadd.f32 0.0, %v178
    %180 = vmatmul.f32.gmra.mxu0 %v160
    %v181 = vpop.f32.mrf.mxu0
    %v182 = vadd.f32 0.0, %v181
    %183 = vdwg.mxu0
    %v184 = vmax.f32 %v179, 1e-30
    %v185 = vmax.f32 %v182, 1e-30
    %v186 = vrsqrt.pop %v184
    %v187 = vmul.f32 %v186, %v184
    %v188 = vmul.f32 %v187, %v186
    %v189 = vmul.f32 0.5, %v188
    %v190 = vsub.f32 1.5, %v189
    %v191 = vmul.f32 %v186, %v190
    %vm192 = vweird.f32 %v184
    %vm193 = vweird.f32 %v186
    %vm194 = vmor %vm192, %vm193
    %v195 = vsel %vm194, %v186, %v191
    %v196 = vrsqrt.pop %v185
    %v197 = vmul.f32 %v196, %v185
    %v198 = vmul.f32 %v197, %v196
    %v199 = vmul.f32 0.5, %v198
    %v200 = vsub.f32 1.5, %v199
    %v201 = vmul.f32 %v196, %v200
    %vm202 = vweird.f32 %v185
    %vm203 = vweird.f32 %v196
    %vm204 = vmor %vm202, %vm203
    %v205 = vsel %vm204, %v196, %v201
    %v206 = vmul.f32 %v184, %v195
    %v207 = vmul.f32 %v185, %v205
    %v208 = vmul.f32 %v206, 0.70710677
    %v209 = vmul.f32 %v207, 0.70710677
    %v210 = vtanh.pop %v208
    %v211 = vtanh.pop %v209
    %v212 = vmin.f32 %v210, 0.996
    %v213 = vmin.f32 %v211, 0.996
    %v214 = vmul.f32 %v212, %v195
    %v215 = vmul.f32 %v213, %v205
    %v216 = vmul.f32 %v214, 1.4142135
    %v217 = vmul.f32 %v215, 1.4142135
    %v218 = vmul.f32 %v216, %v157
    %v219 = vmul.f32 %v217, %v158
    %220 = vst [vmem:[#allocation7] sm:$0xff] %v218
    %221 = vst [vmem:[#allocation7 + $0x8] sm:$0xff] %v219
    // Predicated region
    $region18: #{tpu_custom_call.1} parent=1 // pred_check
      _
    $region19: #{tpu_custom_call.1} parent=1 // pred_check_branch
      %223 = sbr.rel (0) target = $region21
    $region20: #{tpu_custom_call.1} parent=1 // pred_region
      %225 = vsyncadd [#allocation4], 0
      %s226 = sshll.u32 [#allocation7], 4
      %s227 = int_to_ptr.vmem [resolvable:$true] %s226
      %s228 = sshll.u32 %s2, 4
      %s229 = int_to_ptr.hbm [resolvable:$true] %s228
      %234 = dma.vmem_to_hbm [thread:$0]  %s227, 256, %s229, [#allocation4], 128, 128, 8
    $region21: #{tpu_custom_call.1} parent=1 // pred_fallthru
      _
    // Predicated region
    $region22: #{tpu_custom_call.1} parent=1 // pred_check
      _
    $region23: #{tpu_custom_call.1} parent=1 // pred_check_branch
      %236 = sbr.rel (0) target = $region25
    $region24: #{tpu_custom_call.1} parent=1 // pred_region
      %238 = dma.done [#allocation4], 256
    $region25: #{tpu_custom_call.1} parent=1 // pred_fallthru
      _
    %239 = vsyncpa [#allocation3], 1
    %240 = vsyncpa [#allocation6], 1
    %241 = vsyncpa [#allocation4], 1

</llo_original>
